<compile_context>
chip_gen: v7x
topology: tpu7x:2x2x1
jax: 0.10.0
libtpu: 0.0.40
codegen_flags: <defaults>
</compile_context>

<pallas_src>
import functools

import jax
import jax.numpy as jnp
from jax.experimental import pallas as pl
from jax.experimental.pallas import tpu as pltpu


def _modified_model_kernel(x_ref, w_ref, b_ref, o_ref):
    # original_model: Linear -> y = x @ W + b  (MXU matmul, f32 accumulate)
    y = jnp.dot(x_ref[...], w_ref[...], preferred_element_type=jnp.float32)
    y = y + b_ref[...]                          # bias broadcast over batch rows
    # new_layer: Sigmoid, via a single EUP transcendental (tanh).
    o_ref[...] = (0.5 * jnp.tanh(0.5 * y) + 0.5).astype(o_ref.dtype)


@functools.partial(jax.jit, static_argnames=("batch_tile",))
def modified_model_forward(x, w, b, *, batch_tile=1024):
    """x: (B, Din) f32, w: (Din, Dout) f32, b: (1, Dout) f32 -> (B, Dout) f32."""
    B, Din = x.shape
    Dout = w.shape[1]

    # Small / moderate B: one gridless block (no per-step overhead, no padding
    # needed since block == full array dims).  Large B: tile the batch axis
    # with a sublane-aligned tile so Pallas double-buffers x/out DMAs and v7x
    # can shard steps across both TensorCores.
    if B <= batch_tile:
        tb = B
    else:
        tb = batch_tile  # multiple of 8 by construction (default 1024)

    grid = (pl.cdiv(B, tb),)

    cost = pl.CostEstimate(
        flops=2 * B * Din * Dout,
        transcendentals=B * Dout,
        bytes_accessed=4 * (B * Din + Din * Dout + Dout + B * Dout),
    )

    return pl.pallas_call(
        _modified_model_kernel,
        out_shape=jax.ShapeDtypeStruct((B, Dout), jnp.float32),
        grid=grid,
        in_specs=[
            # x: one batch tile per grid step (pipelined DMA).
            pl.BlockSpec((tb, Din), lambda i: (i, 0)),
            # W, b: constant index_map -> resident across all grid steps.
            pl.BlockSpec((Din, Dout), lambda i: (0, 0)),
            pl.BlockSpec((1, Dout), lambda i: (0, 0)),
        ],
        out_specs=pl.BlockSpec((tb, Dout), lambda i: (i, 0)),
        compiler_params=pltpu.CompilerParams(
            dimension_semantics=("parallel",)),
        cost_estimate=cost,
    )(x, w, b)


if __name__ == "__main__":
    key = jax.random.PRNGKey(0)
    kx, kw, kb = jax.random.split(key, 3)

    # Small shapes consistent with the module: Linear(32, 32), batch=256.
    batch, in_features, out_features = 256, 32, 32

    x = jax.random.normal(kx, (batch, in_features), dtype=jnp.float32)
    # Deterministic "original_model" (Linear) parameters.
    w = jax.random.normal(kw, (in_features, out_features), dtype=jnp.float32) * 0.1
    b = jax.random.normal(kb, (1, out_features), dtype=jnp.float32) * 0.1

    out = modified_model_forward(x, w, b)
    jax.block_until_ready(out)

    # Pure-JAX reference of the same semantics.
    ref = jax.nn.sigmoid(x @ w + b)
    assert out.shape == (batch, out_features)
    assert jnp.allclose(out, ref, atol=1e-5, rtol=1e-5)

    print("KERNEL_OK")
</pallas_src>

<mosaic_0001>
module attributes {stable_mosaic.version = 11 : i64} {
  func.func @_modified_model_kernel(%arg0: i32, %arg1: memref<256x32xf32, #tpu.memory_space<vmem>>, %arg2: memref<32x32xf32, #tpu.memory_space<vmem>>, %arg3: memref<1x32xf32, #tpu.memory_space<vmem>>, %arg4: memref<256x32xf32, #tpu.memory_space<vmem>>) attributes {dimension_semantics = [#tpu.dimension_semantics<parallel>], iteration_bounds = array<i64: 1>, scalar_prefetch = 0 : i64, scratch_operands = 0 : i64, tpu.core_type = #tpu.core_type<tc>, window_params = [{transform_indices = @transform_0, window_bounds = array<i64: 256, 32>}, {pipeline_mode = #tpu.pipeline_mode<synchronous>, transform_indices = @transform_1, window_bounds = array<i64: 32, 32>}, {pipeline_mode = #tpu.pipeline_mode<synchronous>, transform_indices = @transform_2, window_bounds = array<i64: 1, 32>}, {transform_indices = @transform_3, window_bounds = array<i64: 256, 32>}]} {
    %c0 = arith.constant 0 : index
    %c0_0 = arith.constant 0 : index
    %0 = vector.load %arg1[%c0, %c0_0] : memref<256x32xf32, #tpu.memory_space<vmem>>, vector<256x32xf32>
    %c0_1 = arith.constant 0 : index
    %c0_2 = arith.constant 0 : index
    %1 = vector.load %arg2[%c0_1, %c0_2] : memref<32x32xf32, #tpu.memory_space<vmem>>, vector<32x32xf32>
    %cst = arith.constant dense<0.000000e+00> : vector<256x32xf32>
    %2 = tpu.matmul %0, %1, %cst {dimension_numbers = #tpu.dot_dimension_numbers<[1], [0], [0], [1], [0, 0, 1, 1], [], []>} : vector<256x32xf32>, vector<32x32xf32>, vector<256x32xf32> -> vector<256x32xf32>
    %c0_3 = arith.constant 0 : index
    %c0_4 = arith.constant 0 : index
    %3 = vector.load %arg3[%c0_3, %c0_4] : memref<1x32xf32, #tpu.memory_space<vmem>>, vector<1x32xf32>
    %4 = vector.broadcast %3 : vector<1x32xf32> to vector<256x32xf32>
    %5 = arith.addf %2, %4 : vector<256x32xf32>
    %cst_5 = arith.constant 5.000000e-01 : f32
    %6 = vector.broadcast %cst_5 : f32 to vector<256x32xf32>
    %7 = arith.mulf %6, %5 : vector<256x32xf32>
    %8 = math.tanh %7 : vector<256x32xf32>
    %cst_6 = arith.constant 5.000000e-01 : f32
    %9 = vector.broadcast %cst_6 : f32 to vector<256x32xf32>
    %10 = arith.mulf %9, %8 : vector<256x32xf32>
    %cst_7 = arith.constant 5.000000e-01 : f32
    %11 = vector.broadcast %cst_7 : f32 to vector<256x32xf32>
    %12 = arith.addf %10, %11 : vector<256x32xf32>
    %c0_8 = arith.constant 0 : index
    %c0_9 = arith.constant 0 : index
    %13 = vector.load %arg4[%c0_8, %c0_9] : memref<256x32xf32, #tpu.memory_space<vmem>>, vector<256x32xf32>
    tpu.vector_store %arg4[%c0_8, %c0_9], %12 {strides = array<i32>} : memref<256x32xf32, #tpu.memory_space<vmem>>, vector<256x32xf32>,
    return
  }
  func.func @transform_0(%arg0: i32) -> (i32, i32) {
    %c0_i32 = arith.constant 0 : i32
    %c0_i32_0 = arith.constant 0 : i32
    return %arg0, %c0_i32 : i32, i32
  }
  func.func @transform_1(%arg0: i32) -> (i32, i32) {
    %c0_i32 = arith.constant 0 : i32
    %c0_i32_0 = arith.constant 0 : i32
    %c0_i32_1 = arith.constant 0 : i32
    return %c0_i32, %c0_i32_0 : i32, i32
  }
  func.func @transform_2(%arg0: i32) -> (i32, i32) {
    %c0_i32 = arith.constant 0 : i32
    %c0_i32_0 = arith.constant 0 : i32
    %c0_i32_1 = arith.constant 0 : i32
    return %c0_i32, %c0_i32_0 : i32, i32
  }
  func.func @transform_3(%arg0: i32) -> (i32, i32) {
    %c0_i32 = arith.constant 0 : i32
    %c0_i32_0 = arith.constant 0 : i32
    return %arg0, %c0_i32 : i32, i32
  }
}

</mosaic_0001>

<llo_original>
// kernel: modified_model_forward.1
$region0: #{modified_model_forward.1}
  #allocation0 [shape = 'u32[]', space=smem, size = 0x4, offset = 0x4, fixed_abs, tag = 'smem constant byte address 0x4 - core index']
  #allocation1 [shape = 'u32[144,128]{1,0:T(1,128)}', space=vmem, size = 0x12000, scoped, tag = 'internal scratch']
  %s0 = inlined_call_operand.vmem [shape: f32[256,32], index: 0, kind: input, shape index: {}]
  %s1 = inlined_call_operand.vmem [shape: f32[32,32], index: 1, kind: input, shape index: {}]
  %s2 = inlined_call_operand.vmem [shape: f32[1,32], index: 2, kind: input, shape index: {}]
  %s3 = inlined_call_operand.vmem [shape: f32[256,32], index: 3, kind: output, shape index: {}]
  %s4 = sld [smem:[#allocation0]]
  $region22: #{modified_model_forward.1} parent=0
    _
  %s6 = ssub.s32 1, %s4
  %s7 = scalar_select 0, %s6, %s4
  // Predicated region
  $region2: #{modified_model_forward.1} parent=0 // pred_check
    _
  $region3: #{modified_model_forward.1} parent=0 // pred_check_branch
    %9 = sbr.rel (0) target = $region5
  $region4: #{modified_model_forward.1} parent=0 // pred_region
    _
  $region5: #{modified_model_forward.1} parent=0 // pred_fallthru
    _
  // Predicated region
  $region6: #{modified_model_forward.1} parent=0 // pred_check
    _
  $region7: #{modified_model_forward.1} parent=0 // pred_check_branch
    %11 = sbr.rel (0) target = $region9
  $region8: #{modified_model_forward.1} parent=0 // pred_region
    _
  $region9: #{modified_model_forward.1} parent=0 // pred_fallthru
    _
  // Predicated region
  $region10: #{modified_model_forward.1} parent=0 // pred_check
    _
  $region11: #{modified_model_forward.1} parent=0 // pred_check_branch
    %13 = sbr.rel (0) target = $region13
  $region12: #{modified_model_forward.1} parent=0 // pred_region
    _
  $region13: #{modified_model_forward.1} parent=0 // pred_fallthru
    _
  %v14 = vld [vmem:[%s0] sm:$0xff]
  %v15 = vld [vmem:[%s0 + $0x8] sm:$0xff]
  %v16 = vld [vmem:[%s0 + $0x10] sm:$0xff]
  %v17 = vld [vmem:[%s0 + $0x18] sm:$0xff]
  %v18 = vld [vmem:[%s0 + $0x20] sm:$0xff]
  %v19 = vld [vmem:[%s0 + $0x28] sm:$0xff]
  %v20 = vld [vmem:[%s0 + $0x30] sm:$0xff]
  %v21 = vld [vmem:[%s0 + $0x38] sm:$0xff]
  %v22 = vld [vmem:[%s0 + $0x40] sm:$0xff]
  %v23 = vld [vmem:[%s0 + $0x48] sm:$0xff]
  %v24 = vld [vmem:[%s0 + $0x50] sm:$0xff]
  %v25 = vld [vmem:[%s0 + $0x58] sm:$0xff]
  %v26 = vld [vmem:[%s0 + $0x60] sm:$0xff]
  %v27 = vld [vmem:[%s0 + $0x68] sm:$0xff]
  %v28 = vld [vmem:[%s0 + $0x70] sm:$0xff]
  %v29 = vld [vmem:[%s0 + $0x78] sm:$0xff]
  %v30 = vld [vmem:[%s0 + $0x80] sm:$0xff]
  %v31 = vld [vmem:[%s0 + $0x88] sm:$0xff]
  %v32 = vld [vmem:[%s0 + $0x90] sm:$0xff]
  %v33 = vld [vmem:[%s0 + $0x98] sm:$0xff]
  %v34 = vld [vmem:[%s0 + $0xa0] sm:$0xff]
  %v35 = vld [vmem:[%s0 + $0xa8] sm:$0xff]
  %v36 = vld [vmem:[%s0 + $0xb0] sm:$0xff]
  %v37 = vld [vmem:[%s0 + $0xb8] sm:$0xff]
  %v38 = vld [vmem:[%s0 + $0xc0] sm:$0xff]
  %v39 = vld [vmem:[%s0 + $0xc8] sm:$0xff]
  %v40 = vld [vmem:[%s0 + $0xd0] sm:$0xff]
  %v41 = vld [vmem:[%s0 + $0xd8] sm:$0xff]
  %v42 = vld [vmem:[%s0 + $0xe0] sm:$0xff]
  %v43 = vld [vmem:[%s0 + $0xe8] sm:$0xff]
  %v44 = vld [vmem:[%s0 + $0xf0] sm:$0xff]
  %v45 = vld [vmem:[%s0 + $0xf8] sm:$0xff]
  %v46 = vld [vmem:[%s1] sm:$0xff]
  %v47 = vld [vmem:[%s1 + $0x8] sm:$0xff]
  %v48 = vld [vmem:[%s1 + $0x10] sm:$0xff]
  %v49 = vld [vmem:[%s1 + $0x18] sm:$0xff]
  %v50 = vld [vmem:[%s2] sm:$0x1]
  %v52 = vlaneseq
  %v53 = vshrl.u32 %v52, 7
  %v54 = vsub.s32 0, %v53
  %v55 = vrot.slane %v50, %v54
  %vm57 = vcmask 261120
  %v59 = vsel %vm57, %v14, 0
  %v62 = vsel %vm57, %v15, 0
  %v65 = vsel %vm57, %v16, 0
  %v68 = vsel %vm57, %v17, 0
  %v71 = vsel %vm57, %v18, 0
  %v74 = vsel %vm57, %v19, 0
  %v77 = vsel %vm57, %v20, 0
  %v80 = vsel %vm57, %v21, 0
  %v83 = vsel %vm57, %v22, 0
  %v86 = vsel %vm57, %v23, 0
  %v89 = vsel %vm57, %v24, 0
  %v92 = vsel %vm57, %v25, 0
  %v95 = vsel %vm57, %v26, 0
  %v98 = vsel %vm57, %v27, 0
  %v101 = vsel %vm57, %v28, 0
  %v104 = vsel %vm57, %v29, 0
  %v107 = vsel %vm57, %v30, 0
  %v110 = vsel %vm57, %v31, 0
  %v113 = vsel %vm57, %v32, 0
  %v116 = vsel %vm57, %v33, 0
  %v119 = vsel %vm57, %v34, 0
  %v122 = vsel %vm57, %v35, 0
  %v125 = vsel %vm57, %v36, 0
  %v128 = vsel %vm57, %v37, 0
  %v131 = vsel %vm57, %v38, 0
  %v134 = vsel %vm57, %v39, 0
  %v137 = vsel %vm57, %v40, 0
  %v140 = vsel %vm57, %v41, 0
  %v143 = vsel %vm57, %v42, 0
  %v146 = vsel %vm57, %v43, 0
  %v149 = vsel %vm57, %v44, 0
  %v152 = vsel %vm57, %v45, 0
  %154 = vmatprep.subr.mxu0 0.0
  %155 = vmatpush1.msra.mxu0 %v46
  %156 = vmatprep.subr.mxu0 0.0
  %157 = vmatpush1.msra.mxu0 %v47
  %158 = vmatprep.subr.mxu0 0.0
  %159 = vmatpush1.msra.mxu0 %v48
  %160 = vmatprep.subr.mxu0 0.0
  %161 = vmatpush1.msra.mxu0 %v49
  %162 = vmatprep.subr.mxu0 0.0
  %163 = vmatpush1.msra.mxu0 0.0
  %164 = vmatprep.subr.mxu0 0.0
  %165 = vmatpush1.msra.mxu0 0.0
  %166 = vmatprep.subr.mxu0 0.0
  %167 = vmatpush1.msra.mxu0 0.0
  %168 = vmatprep.subr.mxu0 0.0
  %169 = vmatpush1.msra.mxu0 0.0
  %170 = vmatprep.subr.mxu0 0.0
  %171 = vmatpush1.msra.mxu0 0.0
  %172 = vmatprep.subr.mxu0 0.0
  %173 = vmatpush1.msra.mxu0 0.0
  %174 = vmatprep.subr.mxu0 0.0
  %175 = vmatpush1.msra.mxu0 0.0
  %176 = vmatprep.subr.mxu0 0.0
  %177 = vmatpush1.msra.mxu0 0.0
  %178 = vmatprep.subr.mxu0 0.0
  %179 = vmatpush1.msra.mxu0 0.0
  %180 = vmatprep.subr.mxu0 0.0
  %181 = vmatpush1.msra.mxu0 0.0
  %182 = vmatprep.subr.mxu0 0.0
  %183 = vmatpush1.msra.mxu0 0.0
  %184 = vmatprep.subr.mxu0 0.0
  %185 = vmatpush1.msra.mxu0 0.0
  %186 = vmatprep.subr.mxu0 0.0
  %187 = vmatpush1.msra.mxu0 0.0
  %188 = vmatprep.subr.mxu0 0.0
  %189 = vmatpush1.msra.mxu0 0.0
  %190 = vmatprep.subr.mxu0 0.0
  %191 = vmatpush1.msra.mxu0 0.0
  %192 = vmatprep.subr.mxu0 0.0
  %193 = vmatpush1.msra.mxu0 0.0
  %194 = vmatprep.subr.mxu0 0.0
  %195 = vmatpush1.msra.mxu0 0.0
  %196 = vmatprep.subr.mxu0 0.0
  %197 = vmatpush1.msra.mxu0 0.0
  %198 = vmatprep.subr.mxu0 0.0
  %199 = vmatpush1.msra.mxu0 0.0
  %200 = vmatprep.subr.mxu0 0.0
  %201 = vmatpush1.msra.mxu0 0.0
  %202 = vmatprep.subr.mxu0 0.0
  %203 = vmatpush1.msra.mxu0 0.0
  %204 = vmatprep.subr.mxu0 0.0
  %205 = vmatpush1.msra.mxu0 0.0
  %206 = vmatprep.subr.mxu0 0.0
  %207 = vmatpush1.msra.mxu0 0.0
  %208 = vmatprep.subr.mxu0 0.0
  %209 = vmatpush1.msra.mxu0 0.0
  %210 = vmatprep.subr.mxu0 0.0
  %211 = vmatpush1.msra.mxu0 0.0
  %212 = vmatprep.subr.mxu0 0.0
  %213 = vmatpush1.msra.mxu0 0.0
  %214 = vmatprep.subr.mxu0 0.0
  %215 = vmatpush1.msra.mxu0 0.0
  %216 = vmatprep.subr.mxu0 0.0
  %217 = vmatpush1.msra.mxu0 0.0
  %218 = vmatprep.mubr.f32.mxu0 0.0
  %219 = vmatmul.mubr.f32.gmra.mrb[0].mxu0 %v59
  %v220 = vpop.f32.mrb[0].mxu0
  %v221 = vadd.f32 %v55, %v220
  %v222 = vpop.f32.mrb[0].mxu0
  %223 = vmatprep.mubr.f32.mxu0 0.0
  %224 = vmatmul.mubr.f32.gmra.mrb[0].mxu0 %v62
  %v225 = vpop.f32.mrb[0].mxu0
  %v226 = vadd.f32 %v55, %v225
  %v227 = vpop.f32.mrb[0].mxu0
  %228 = vmatprep.mubr.f32.mxu0 0.0
  %229 = vmatmul.mubr.f32.gmra.mrb[0].mxu0 %v65
  %v230 = vpop.f32.mrb[0].mxu0
  %v231 = vadd.f32 %v55, %v230
  %v232 = vpop.f32.mrb[0].mxu0
  %233 = vmatprep.mubr.f32.mxu0 0.0
  %234 = vmatmul.mubr.f32.gmra.mrb[0].mxu0 %v68
  %v235 = vpop.f32.mrb[0].mxu0
  %v236 = vadd.f32 %v55, %v235
  %v237 = vpop.f32.mrb[0].mxu0
  %238 = vmatprep.mubr.f32.mxu0 0.0
  %239 = vmatmul.mubr.f32.gmra.mrb[0].mxu0 %v71
  %v240 = vpop.f32.mrb[0].mxu0
  %v241 = vadd.f32 %v55, %v240
  %v242 = vpop.f32.mrb[0].mxu0
  %243 = vmatprep.mubr.f32.mxu0 0.0
  %244 = vmatmul.mubr.f32.gmra.mrb[0].mxu0 %v74
  %v245 = vpop.f32.mrb[0].mxu0
  %v246 = vadd.f32 %v55, %v245
  %v247 = vpop.f32.mrb[0].mxu0
  %248 = vmatprep.mubr.f32.mxu0 0.0
  %249 = vmatmul.mubr.f32.gmra.mrb[0].mxu0 %v77
  %v250 = vpop.f32.mrb[0].mxu0
  %v251 = vadd.f32 %v55, %v250
  %v252 = vpop.f32.mrb[0].mxu0
  %253 = vmatprep.mubr.f32.mxu0 0.0
  %254 = vmatmul.mubr.f32.gmra.mrb[0].mxu0 %v80
  %v255 = vpop.f32.mrb[0].mxu0
  %v256 = vadd.f32 %v55, %v255
  %v257 = vpop.f32.mrb[0].mxu0
  %258 = vmatprep.mubr.f32.mxu0 0.0
  %259 = vmatmul.mubr.f32.gmra.mrb[0].mxu0 %v83
  %v260 = vpop.f32.mrb[0].mxu0
  %v261 = vadd.f32 %v55, %v260
  %v262 = vpop.f32.mrb[0].mxu0
  %263 = vmatprep.mubr.f32.mxu0 0.0
  %264 = vmatmul.mubr.f32.gmra.mrb[0].mxu0 %v86
  %v265 = vpop.f32.mrb[0].mxu0
  %v266 = vadd.f32 %v55, %v265
  %v267 = vpop.f32.mrb[0].mxu0
  %268 = vmatprep.mubr.f32.mxu0 0.0
  %269 = vmatmul.mubr.f32.gmra.mrb[0].mxu0 %v89
  %v270 = vpop.f32.mrb[0].mxu0
  %v271 = vadd.f32 %v55, %v270
  %v272 = vpop.f32.mrb[0].mxu0
  %273 = vmatprep.mubr.f32.mxu0 0.0
  %274 = vmatmul.mubr.f32.gmra.mrb[0].mxu0 %v92
  %v275 = vpop.f32.mrb[0].mxu0
  %v276 = vadd.f32 %v55, %v275
  %v277 = vpop.f32.mrb[0].mxu0
  %278 = vmatprep.mubr.f32.mxu0 0.0
  %279 = vmatmul.mubr.f32.gmra.mrb[0].mxu0 %v95
  %v280 = vpop.f32.mrb[0].mxu0
  %v281 = vadd.f32 %v55, %v280
  %v282 = vpop.f32.mrb[0].mxu0
  %283 = vmatprep.mubr.f32.mxu0 0.0
  %284 = vmatmul.mubr.f32.gmra.mrb[0].mxu0 %v98
  %v285 = vpop.f32.mrb[0].mxu0
  %v286 = vadd.f32 %v55, %v285
  %v287 = vpop.f32.mrb[0].mxu0
  %288 = vmatprep.mubr.f32.mxu0 0.0
  %289 = vmatmul.mubr.f32.gmra.mrb[0].mxu0 %v101
  %v290 = vpop.f32.mrb[0].mxu0
  %v291 = vadd.f32 %v55, %v290
  %v292 = vpop.f32.mrb[0].mxu0
  %293 = vmatprep.mubr.f32.mxu0 0.0
  %294 = vmatmul.mubr.f32.gmra.mrb[0].mxu0 %v104
  %v295 = vpop.f32.mrb[0].mxu0
  %v296 = vadd.f32 %v55, %v295
  %v297 = vpop.f32.mrb[0].mxu0
  %298 = vmatprep.mubr.f32.mxu0 0.0
  %299 = vmatmul.mubr.f32.gmra.mrb[0].mxu0 %v107
  %v300 = vpop.f32.mrb[0].mxu0
  %v301 = vadd.f32 %v55, %v300
  %v302 = vpop.f32.mrb[0].mxu0
  %303 = vmatprep.mubr.f32.mxu0 0.0
  %304 = vmatmul.mubr.f32.gmra.mrb[0].mxu0 %v110
  %v305 = vpop.f32.mrb[0].mxu0
  %v306 = vadd.f32 %v55, %v305
  %v307 = vpop.f32.mrb[0].mxu0
  %308 = vmatprep.mubr.f32.mxu0 0.0
  %309 = vmatmul.mubr.f32.gmra.mrb[0].mxu0 %v113
  %v310 = vpop.f32.mrb[0].mxu0
  %v311 = vadd.f32 %v55, %v310
  %v312 = vpop.f32.mrb[0].mxu0
  %313 = vmatprep.mubr.f32.mxu0 0.0
  %314 = vmatmul.mubr.f32.gmra.mrb[0].mxu0 %v116
  %v315 = vpop.f32.mrb[0].mxu0
  %v316 = vadd.f32 %v55, %v315
  %v317 = vpop.f32.mrb[0].mxu0
  %318 = vmatprep.mubr.f32.mxu0 0.0
  %319 = vmatmul.mubr.f32.gmra.mrb[0].mxu0 %v119
  %v320 = vpop.f32.mrb[0].mxu0
  %v321 = vadd.f32 %v55, %v320
  %v322 = vpop.f32.mrb[0].mxu0
  %323 = vmatprep.mubr.f32.mxu0 0.0
  %324 = vmatmul.mubr.f32.gmra.mrb[0].mxu0 %v122
  %v325 = vpop.f32.mrb[0].mxu0
  %v326 = vadd.f32 %v55, %v325
  %v327 = vpop.f32.mrb[0].mxu0
  %328 = vmatprep.mubr.f32.mxu0 0.0
  %329 = vmatmul.mubr.f32.gmra.mrb[0].mxu0 %v125
  %v330 = vpop.f32.mrb[0].mxu0
  %v331 = vadd.f32 %v55, %v330
  %v332 = vpop.f32.mrb[0].mxu0
  %333 = vmatprep.mubr.f32.mxu0 0.0
  %334 = vmatmul.mubr.f32.gmra.mrb[0].mxu0 %v128
  %v335 = vpop.f32.mrb[0].mxu0
  %v336 = vadd.f32 %v55, %v335
  %v337 = vpop.f32.mrb[0].mxu0
  %338 = vmatprep.mubr.f32.mxu0 0.0
  %339 = vmatmul.mubr.f32.gmra.mrb[0].mxu0 %v131
  %v340 = vpop.f32.mrb[0].mxu0
  %v341 = vadd.f32 %v55, %v340
  %v342 = vpop.f32.mrb[0].mxu0
  %343 = vmatprep.mubr.f32.mxu0 0.0
  %344 = vmatmul.mubr.f32.gmra.mrb[0].mxu0 %v134
  %v345 = vpop.f32.mrb[0].mxu0
  %v346 = vadd.f32 %v55, %v345
  %v347 = vpop.f32.mrb[0].mxu0
  %348 = vmatprep.mubr.f32.mxu0 0.0
  %349 = vmatmul.mubr.f32.gmra.mrb[0].mxu0 %v137
  %v350 = vpop.f32.mrb[0].mxu0
  %v351 = vadd.f32 %v55, %v350
  %v352 = vpop.f32.mrb[0].mxu0
  %353 = vmatprep.mubr.f32.mxu0 0.0
  %354 = vmatmul.mubr.f32.gmra.mrb[0].mxu0 %v140
  %v355 = vpop.f32.mrb[0].mxu0
  %v356 = vadd.f32 %v55, %v355
  %v357 = vpop.f32.mrb[0].mxu0
  %358 = vmatprep.mubr.f32.mxu0 0.0
  %359 = vmatmul.mubr.f32.gmra.mrb[0].mxu0 %v143
  %v360 = vpop.f32.mrb[0].mxu0
  %v361 = vadd.f32 %v55, %v360
  %v362 = vpop.f32.mrb[0].mxu0
  %363 = vmatprep.mubr.f32.mxu0 0.0
  %364 = vmatmul.mubr.f32.gmra.mrb[0].mxu0 %v146
  %v365 = vpop.f32.mrb[0].mxu0
  %v366 = vadd.f32 %v55, %v365
  %v367 = vpop.f32.mrb[0].mxu0
  %368 = vmatprep.mubr.f32.mxu0 0.0
  %369 = vmatmul.mubr.f32.gmra.mrb[0].mxu0 %v149
  %v370 = vpop.f32.mrb[0].mxu0
  %v371 = vadd.f32 %v55, %v370
  %v372 = vpop.f32.mrb[0].mxu0
  %373 = vmatprep.mubr.f32.mxu0 0.0
  %374 = vmatmul.mubr.f32.gmra.mrb[0].mxu0 %v152
  %v375 = vpop.f32.mrb[0].mxu0
  %v376 = vadd.f32 %v55, %v375
  %v377 = vpop.f32.mrb[0].mxu0
  %378 = vdwg.mxu0
  %v379 = vmul.f32 %v221, 0.5
  %v380 = vmul.f32 %v226, 0.5
  %v381 = vmul.f32 %v231, 0.5
  %v382 = vmul.f32 %v236, 0.5
  %v383 = vmul.f32 %v241, 0.5
  %v384 = vmul.f32 %v246, 0.5
  %v385 = vmul.f32 %v251, 0.5
  %v386 = vmul.f32 %v256, 0.5
  %v387 = vmul.f32 %v261, 0.5
  %v388 = vmul.f32 %v266, 0.5
  %v389 = vmul.f32 %v271, 0.5
  %v390 = vmul.f32 %v276, 0.5
  %v391 = vmul.f32 %v281, 0.5
  %v392 = vmul.f32 %v286, 0.5
  %v393 = vmul.f32 %v291, 0.5
  %v394 = vmul.f32 %v296, 0.5
  %v395 = vmul.f32 %v301, 0.5
  %v396 = vmul.f32 %v306, 0.5
  %v397 = vmul.f32 %v311, 0.5
  %v398 = vmul.f32 %v316, 0.5
  %v399 = vmul.f32 %v321, 0.5
  %v400 = vmul.f32 %v326, 0.5
  %v401 = vmul.f32 %v331, 0.5
  %v402 = vmul.f32 %v336, 0.5
  %v403 = vmul.f32 %v341, 0.5
  %v404 = vmul.f32 %v346, 0.5
  %v405 = vmul.f32 %v351, 0.5
  %v406 = vmul.f32 %v356, 0.5
  %v407 = vmul.f32 %v361, 0.5
  %v408 = vmul.f32 %v366, 0.5
  %v409 = vmul.f32 %v371, 0.5
  %v410 = vmul.f32 %v376, 0.5
  %v411 = vtanh.pop %v379
  %v412 = vtanh.pop %v380
  %v413 = vtanh.pop %v381
  %v414 = vtanh.pop %v382
  %v415 = vtanh.pop %v383
  %v416 = vtanh.pop %v384
  %v417 = vtanh.pop %v385
  %v418 = vtanh.pop %v386
  %v419 = vtanh.pop %v387
  %v420 = vtanh.pop %v388
  %v421 = vtanh.pop %v389
  %v422 = vtanh.pop %v390
  %v423 = vtanh.pop %v391
  %v424 = vtanh.pop %v392
  %v425 = vtanh.pop %v393
  %v426 = vtanh.pop %v394
  %v427 = vtanh.pop %v395
  %v428 = vtanh.pop %v396
  %v429 = vtanh.pop %v397
  %v430 = vtanh.pop %v398
  %v431 = vtanh.pop %v399
  %v432 = vtanh.pop %v400
  %v433 = vtanh.pop %v401
  %v434 = vtanh.pop %v402
  %v435 = vtanh.pop %v403
  %v436 = vtanh.pop %v404
  %v437 = vtanh.pop %v405
  %v438 = vtanh.pop %v406
  %v439 = vtanh.pop %v407
  %v440 = vtanh.pop %v408
  %v441 = vtanh.pop %v409
  %v442 = vtanh.pop %v410
  %v443 = vmul.f32 %v411, 0.5
  %v444 = vmul.f32 %v412, 0.5
  %v445 = vmul.f32 %v413, 0.5
  %v446 = vmul.f32 %v414, 0.5
  %v447 = vmul.f32 %v415, 0.5
  %v448 = vmul.f32 %v416, 0.5
  %v449 = vmul.f32 %v417, 0.5
  %v450 = vmul.f32 %v418, 0.5
  %v451 = vmul.f32 %v419, 0.5
  %v452 = vmul.f32 %v420, 0.5
  %v453 = vmul.f32 %v421, 0.5
  %v454 = vmul.f32 %v422, 0.5
  %v455 = vmul.f32 %v423, 0.5
  %v456 = vmul.f32 %v424, 0.5
  %v457 = vmul.f32 %v425, 0.5
  %v458 = vmul.f32 %v426, 0.5
  %v459 = vmul.f32 %v427, 0.5
  %v460 = vmul.f32 %v428, 0.5
  %v461 = vmul.f32 %v429, 0.5
  %v462 = vmul.f32 %v430, 0.5
  %v463 = vmul.f32 %v431, 0.5
  %v464 = vmul.f32 %v432, 0.5
  %v465 = vmul.f32 %v433, 0.5
  %v466 = vmul.f32 %v434, 0.5
  %v467 = vmul.f32 %v435, 0.5
  %v468 = vmul.f32 %v436, 0.5
  %v469 = vmul.f32 %v437, 0.5
  %v470 = vmul.f32 %v438, 0.5
  %v471 = vmul.f32 %v439, 0.5
  %v472 = vmul.f32 %v440, 0.5
  %v473 = vmul.f32 %v441, 0.5
  %v474 = vmul.f32 %v442, 0.5
  %v475 = vadd.f32 %v443, 0.5
  %v476 = vadd.f32 %v444, 0.5
  %v477 = vadd.f32 %v445, 0.5
  %v478 = vadd.f32 %v446, 0.5
  %v479 = vadd.f32 %v447, 0.5
  %v480 = vadd.f32 %v448, 0.5
  %v481 = vadd.f32 %v449, 0.5
  %v482 = vadd.f32 %v450, 0.5
  %v483 = vadd.f32 %v451, 0.5
  %v484 = vadd.f32 %v452, 0.5
  %v485 = vadd.f32 %v453, 0.5
  %v486 = vadd.f32 %v454, 0.5
  %v487 = vadd.f32 %v455, 0.5
  %v488 = vadd.f32 %v456, 0.5
  %v489 = vadd.f32 %v457, 0.5
  %v490 = vadd.f32 %v458, 0.5
  %v491 = vadd.f32 %v459, 0.5
  %v492 = vadd.f32 %v460, 0.5
  %v493 = vadd.f32 %v461, 0.5
  %v494 = vadd.f32 %v462, 0.5
  %v495 = vadd.f32 %v463, 0.5
  %v496 = vadd.f32 %v464, 0.5
  %v497 = vadd.f32 %v465, 0.5
  %v498 = vadd.f32 %v466, 0.5
  %v499 = vadd.f32 %v467, 0.5
  %v500 = vadd.f32 %v468, 0.5
  %v501 = vadd.f32 %v469, 0.5
  %v502 = vadd.f32 %v470, 0.5
  %v503 = vadd.f32 %v471, 0.5
  %v504 = vadd.f32 %v472, 0.5
  %v505 = vadd.f32 %v473, 0.5
  %v506 = vadd.f32 %v474, 0.5
  %507 = vst.msk [vmem:[%s3] sm:$0xff] %vm57, %v475
  %508 = vst.msk [vmem:[%s3 + $0x8] sm:$0xff] %vm57, %v476
  %509 = vst.msk [vmem:[%s3 + $0x10] sm:$0xff] %vm57, %v477
  %510 = vst.msk [vmem:[%s3 + $0x18] sm:$0xff] %vm57, %v478
  %511 = vst.msk [vmem:[%s3 + $0x20] sm:$0xff] %vm57, %v479
  %512 = vst.msk [vmem:[%s3 + $0x28] sm:$0xff] %vm57, %v480
  %513 = vst.msk [vmem:[%s3 + $0x30] sm:$0xff] %vm57, %v481
  %514 = vst.msk [vmem:[%s3 + $0x38] sm:$0xff] %vm57, %v482
  %515 = vst.msk [vmem:[%s3 + $0x40] sm:$0xff] %vm57, %v483
  %516 = vst.msk [vmem:[%s3 + $0x48] sm:$0xff] %vm57, %v484
  %517 = vst.msk [vmem:[%s3 + $0x50] sm:$0xff] %vm57, %v485
  %518 = vst.msk [vmem:[%s3 + $0x58] sm:$0xff] %vm57, %v486
  %519 = vst.msk [vmem:[%s3 + $0x60] sm:$0xff] %vm57, %v487
  %520 = vst.msk [vmem:[%s3 + $0x68] sm:$0xff] %vm57, %v488
  %521 = vst.msk [vmem:[%s3 + $0x70] sm:$0xff] %vm57, %v489
  %522 = vst.msk [vmem:[%s3 + $0x78] sm:$0xff] %vm57, %v490
  %523 = vst.msk [vmem:[%s3 + $0x80] sm:$0xff] %vm57, %v491
  %524 = vst.msk [vmem:[%s3 + $0x88] sm:$0xff] %vm57, %v492
  %525 = vst.msk [vmem:[%s3 + $0x90] sm:$0xff] %vm57, %v493
  %526 = vst.msk [vmem:[%s3 + $0x98] sm:$0xff] %vm57, %v494
  %527 = vst.msk [vmem:[%s3 + $0xa0] sm:$0xff] %vm57, %v495
  %528 = vst.msk [vmem:[%s3 + $0xa8] sm:$0xff] %vm57, %v496
  %529 = vst.msk [vmem:[%s3 + $0xb0] sm:$0xff] %vm57, %v497
  %530 = vst.msk [vmem:[%s3 + $0xb8] sm:$0xff] %vm57, %v498
  %531 = vst.msk [vmem:[%s3 + $0xc0] sm:$0xff] %vm57, %v499
  %532 = vst.msk [vmem:[%s3 + $0xc8] sm:$0xff] %vm57, %v500
  %533 = vst.msk [vmem:[%s3 + $0xd0] sm:$0xff] %vm57, %v501
  %534 = vst.msk [vmem:[%s3 + $0xd8] sm:$0xff] %vm57, %v502
  %535 = vst.msk [vmem:[%s3 + $0xe0] sm:$0xff] %vm57, %v503
  %536 = vst.msk [vmem:[%s3 + $0xe8] sm:$0xff] %vm57, %v504
  %537 = vst.msk [vmem:[%s3 + $0xf0] sm:$0xff] %vm57, %v505
  %538 = vst.msk [vmem:[%s3 + $0xf8] sm:$0xff] %vm57, %v506
  // Predicated region
  $region14: #{modified_model_forward.1} parent=0 // pred_check
    _
  $region15: #{modified_model_forward.1} parent=0 // pred_check_branch
    %540 = sbr.rel (0) target = $region17
  $region16: #{modified_model_forward.1} parent=0 // pred_region
    _
  $region17: #{modified_model_forward.1} parent=0 // pred_fallthru
    _
  // Predicated region
  $region18: #{modified_model_forward.1} parent=0 // pred_check
    _
  $region19: #{modified_model_forward.1} parent=0 // pred_check_branch
    %542 = sbr.rel (0) target = $region21
  $region20: #{modified_model_forward.1} parent=0 // pred_region
    _
  $region21: #{modified_model_forward.1} parent=0 // pred_fallthru
    _

</llo_original>
